<compile_context>
chip_gen: v6e
topology: v6e:2x2x1
jax: 0.10.0
libtpu: 0.0.40
codegen_flags: <defaults>
</compile_context>

<pallas_src>
import jax
import jax.numpy as jnp
from jax.experimental import pallas as pl
from jax.experimental.pallas import tpu as pltpu

IN_FEATURES = 41
H1 = 20
H2 = 10
OUT_FEATURES = 4

# Rows of x per grid step. With f32 x, per-step VMEM after lane padding is
# roughly: x 8192*128*4 B = 4 MiB and out 8192*128*4 B = 4 MiB, double-buffered
# -> ~16-17 MiB total, safe on every generation with the limit below.
_TILE_B_CAP = 8192
_VMEM_LIMIT_BYTES = 48 << 20  # raise v5e's 16 MiB scoped default; < v7x 64 MiB


def mlp_kernel(x_ref, w1_ref, b1_ref, w2_ref, b2_ref, w3_ref, b3_ref, o_ref):
    # f32 operands throughout; MXU accumulates in f32. Bias + ReLU on the VPU.
    h = jnp.dot(x_ref[...], w1_ref[...], preferred_element_type=jnp.float32)
    h = jnp.maximum(h + b1_ref[...], 0.0)
    h = jnp.dot(h, w2_ref[...], preferred_element_type=jnp.float32)
    h = jnp.maximum(h + b2_ref[...], 0.0)
    h = jnp.dot(h, w3_ref[...], preferred_element_type=jnp.float32)
    o_ref[...] = (h + b3_ref[...]).astype(o_ref.dtype)


def nn_model_forward(x, params):
    """x: [B, 41] float32. params: dict of f32 transposed weights + f32 biases.

    Returns [B, 4] float32 (same semantics as the PyTorch nn_model forward).
    """
    w1, b1 = params["w1"], params["b1"]
    w2, b2 = params["w2"], params["b2"]
    w3, b3 = params["w3"], params["b3"]

    B = x.shape[0]
    # Full-array block when B is small (satisfies the (8,128) rule via
    # "equals the full dim"); otherwise a large fixed tile + partial last block.
    tile_b = B if B <= _TILE_B_CAP else _TILE_B_CAP
    grid = (pl.cdiv(B, tile_b),)

    # Weights/biases: full blocks, same block index every step -> VMEM-resident.
    def resident(shape):
        return pl.BlockSpec(shape, lambda i: (0,) * len(shape))

    return pl.pallas_call(
        mlp_kernel,
        out_shape=jax.ShapeDtypeStruct((B, OUT_FEATURES), jnp.float32),
        grid_spec=pltpu.PrefetchScalarGridSpec(
            num_scalar_prefetch=0,
            grid=grid,
            in_specs=[
                pl.BlockSpec((tile_b, IN_FEATURES), lambda i: (i, 0)),
                resident(w1.shape), resident(b1.shape),
                resident(w2.shape), resident(b2.shape),
                resident(w3.shape), resident(b3.shape),
            ],
            out_specs=pl.BlockSpec((tile_b, OUT_FEATURES), lambda i: (i, 0)),
        ),
        compiler_params=pltpu.CompilerParams(
            # Batch tiles are independent: lets v7x shard them across its 2 TCs;
            # harmless (no-op) on v5e/v6e.
            dimension_semantics=("parallel",),
            vmem_limit_bytes=_VMEM_LIMIT_BYTES,
        ),
    )(x, w1, b1, w2, b2, w3, b3)


def init_params(key):
    """Deterministic init mimicking nn.Linear shapes:
    fc1: (20, 41), fc2: (10, 20), fc3: (4, 10) -> stored transposed, all f32."""
    ks = jax.random.split(key, 6)

    def linear(kw, kb, fan_in, fan_out):
        bound = 1.0 / jnp.sqrt(fan_in)
        w = jax.random.uniform(kw, (fan_in, fan_out), jnp.float32, -bound, bound)
        b = jax.random.uniform(kb, (1, fan_out), jnp.float32, -bound, bound)
        return w, b

    w1, b1 = linear(ks[0], ks[1], IN_FEATURES, H1)
    w2, b2 = linear(ks[2], ks[3], H1, H2)
    w3, b3 = linear(ks[4], ks[5], H2, OUT_FEATURES)
    return {"w1": w1, "b1": b1, "w2": w2, "b2": b2, "w3": w3, "b3": b3}


def reference_forward(x, p):
    """Pure-JAX f32 reference (same recipe as torch f32 Linear + ReLU stack)."""
    h = jnp.dot(x, p["w1"], preferred_element_type=jnp.float32) + p["b1"]
    h = jnp.maximum(h, 0.0)
    h = jnp.dot(h, p["w2"], preferred_element_type=jnp.float32) + p["b2"]
    h = jnp.maximum(h, 0.0)
    return jnp.dot(h, p["w3"], preferred_element_type=jnp.float32) + p["b3"]


if __name__ == "__main__":
    key = jax.random.PRNGKey(0)
    k_x, k_p = jax.random.split(key)
    params = init_params(k_p)

    # Small case (single full-array block) + a multi-tile case with a partial
    # final block to exercise the batch grid.
    for B in (8, 8200):
        x = jax.random.normal(jax.random.fold_in(k_x, B), (B, IN_FEATURES),
                              jnp.float32)
        out = jax.block_until_ready(nn_model_forward(x, params))
        ref = reference_forward(x, params)
        assert out.shape == (B, OUT_FEATURES)
        assert jnp.allclose(out, ref, atol=1e-3, rtol=1e-3), \
            f"mismatch vs reference (B={B})"

    print("KERNEL_OK")
</pallas_src>

<mosaic_0001>
module attributes {stable_mosaic.version = 11 : i64} {
  func.func @mlp_kernel(%arg0: i32, %arg1: memref<8x41xf32, #tpu.memory_space<vmem>>, %arg2: memref<41x20xf32, #tpu.memory_space<vmem>>, %arg3: memref<1x20xf32, #tpu.memory_space<vmem>>, %arg4: memref<20x10xf32, #tpu.memory_space<vmem>>, %arg5: memref<1x10xf32, #tpu.memory_space<vmem>>, %arg6: memref<10x4xf32, #tpu.memory_space<vmem>>, %arg7: memref<1x4xf32, #tpu.memory_space<vmem>>, %arg8: memref<8x4xf32, #tpu.memory_space<vmem>>) attributes {dimension_semantics = [#tpu.dimension_semantics<parallel>], iteration_bounds = array<i64: 1>, scalar_prefetch = 0 : i64, scratch_operands = 0 : i64, tpu.core_type = #tpu.core_type<tc>, window_params = [{transform_indices = @transform_0, window_bounds = array<i64: 8, 41>}, {pipeline_mode = #tpu.pipeline_mode<synchronous>, transform_indices = @transform_1, window_bounds = array<i64: 41, 20>}, {pipeline_mode = #tpu.pipeline_mode<synchronous>, transform_indices = @transform_2, window_bounds = array<i64: 1, 20>}, {pipeline_mode = #tpu.pipeline_mode<synchronous>, transform_indices = @transform_3, window_bounds = array<i64: 20, 10>}, {pipeline_mode = #tpu.pipeline_mode<synchronous>, transform_indices = @transform_4, window_bounds = array<i64: 1, 10>}, {pipeline_mode = #tpu.pipeline_mode<synchronous>, transform_indices = @transform_5, window_bounds = array<i64: 10, 4>}, {pipeline_mode = #tpu.pipeline_mode<synchronous>, transform_indices = @transform_6, window_bounds = array<i64: 1, 4>}, {transform_indices = @transform_7, window_bounds = array<i64: 8, 4>}]} {
    %c0 = arith.constant 0 : index
    %c0_0 = arith.constant 0 : index
    %0 = vector.load %arg1[%c0, %c0_0] : memref<8x41xf32, #tpu.memory_space<vmem>>, vector<8x41xf32>
    %c0_1 = arith.constant 0 : index
    %c0_2 = arith.constant 0 : index
    %1 = vector.load %arg2[%c0_1, %c0_2] : memref<41x20xf32, #tpu.memory_space<vmem>>, vector<41x20xf32>
    %cst = arith.constant dense<0.000000e+00> : vector<8x20xf32>
    %2 = tpu.matmul %0, %1, %cst {dimension_numbers = #tpu.dot_dimension_numbers<[1], [0], [0], [1], [0, 0, 1, 1], [], []>} : vector<8x41xf32>, vector<41x20xf32>, vector<8x20xf32> -> vector<8x20xf32>
    %c0_3 = arith.constant 0 : index
    %c0_4 = arith.constant 0 : index
    %3 = vector.load %arg3[%c0_3, %c0_4] : memref<1x20xf32, #tpu.memory_space<vmem>>, vector<1x20xf32>
    %4 = vector.broadcast %3 : vector<1x20xf32> to vector<8x20xf32>
    %5 = arith.addf %2, %4 : vector<8x20xf32>
    %cst_5 = arith.constant 0.000000e+00 : f32
    %6 = vector.broadcast %cst_5 : f32 to vector<8x20xf32>
    %7 = arith.maximumf %5, %6 : vector<8x20xf32>
    %c0_6 = arith.constant 0 : index
    %c0_7 = arith.constant 0 : index
    %8 = vector.load %arg4[%c0_6, %c0_7] : memref<20x10xf32, #tpu.memory_space<vmem>>, vector<20x10xf32>
    %cst_8 = arith.constant dense<0.000000e+00> : vector<8x10xf32>
    %9 = tpu.matmul %7, %8, %cst_8 {dimension_numbers = #tpu.dot_dimension_numbers<[1], [0], [0], [1], [0, 0, 1, 1], [], []>} : vector<8x20xf32>, vector<20x10xf32>, vector<8x10xf32> -> vector<8x10xf32>
    %c0_9 = arith.constant 0 : index
    %c0_10 = arith.constant 0 : index
    %10 = vector.load %arg5[%c0_9, %c0_10] : memref<1x10xf32, #tpu.memory_space<vmem>>, vector<1x10xf32>
    %11 = vector.broadcast %10 : vector<1x10xf32> to vector<8x10xf32>
    %12 = arith.addf %9, %11 : vector<8x10xf32>
    %cst_11 = arith.constant 0.000000e+00 : f32
    %13 = vector.broadcast %cst_11 : f32 to vector<8x10xf32>
    %14 = arith.maximumf %12, %13 : vector<8x10xf32>
    %c0_12 = arith.constant 0 : index
    %c0_13 = arith.constant 0 : index
    %15 = vector.load %arg6[%c0_12, %c0_13] : memref<10x4xf32, #tpu.memory_space<vmem>>, vector<10x4xf32>
    %cst_14 = arith.constant dense<0.000000e+00> : vector<8x4xf32>
    %16 = tpu.matmul %14, %15, %cst_14 {dimension_numbers = #tpu.dot_dimension_numbers<[1], [0], [0], [1], [0, 0, 1, 1], [], []>} : vector<8x10xf32>, vector<10x4xf32>, vector<8x4xf32> -> vector<8x4xf32>
    %c0_15 = arith.constant 0 : index
    %c0_16 = arith.constant 0 : index
    %17 = vector.load %arg7[%c0_15, %c0_16] : memref<1x4xf32, #tpu.memory_space<vmem>>, vector<1x4xf32>
    %18 = vector.broadcast %17 : vector<1x4xf32> to vector<8x4xf32>
    %19 = arith.addf %16, %18 : vector<8x4xf32>
    %c0_17 = arith.constant 0 : index
    %c0_18 = arith.constant 0 : index
    %20 = vector.load %arg8[%c0_17, %c0_18] : memref<8x4xf32, #tpu.memory_space<vmem>>, vector<8x4xf32>
    tpu.vector_store %arg8[%c0_17, %c0_18], %19 {strides = array<i32>} : memref<8x4xf32, #tpu.memory_space<vmem>>, vector<8x4xf32>,
    return
  }
  func.func @transform_0(%arg0: i32) -> (i32, i32) {
    %c0_i32 = arith.constant 0 : i32
    %c0_i32_0 = arith.constant 0 : i32
    return %arg0, %c0_i32 : i32, i32
  }
  func.func @transform_1(%arg0: i32) -> (i32, i32) {
    %c0_i32 = arith.constant 0 : i32
    %c0_i32_0 = arith.constant 0 : i32
    %c0_i32_1 = arith.constant 0 : i32
    return %c0_i32, %c0_i32_0 : i32, i32
  }
  func.func @transform_2(%arg0: i32) -> (i32, i32) {
    %c0_i32 = arith.constant 0 : i32
    %c0_i32_0 = arith.constant 0 : i32
    %c0_i32_1 = arith.constant 0 : i32
    return %c0_i32, %c0_i32_0 : i32, i32
  }
  func.func @transform_3(%arg0: i32) -> (i32, i32) {
    %c0_i32 = arith.constant 0 : i32
    %c0_i32_0 = arith.constant 0 : i32
    %c0_i32_1 = arith.constant 0 : i32
    return %c0_i32, %c0_i32_0 : i32, i32
  }
  func.func @transform_4(%arg0: i32) -> (i32, i32) {
    %c0_i32 = arith.constant 0 : i32
    %c0_i32_0 = arith.constant 0 : i32
    %c0_i32_1 = arith.constant 0 : i32
    return %c0_i32, %c0_i32_0 : i32, i32
  }
  func.func @transform_5(%arg0: i32) -> (i32, i32) {
    %c0_i32 = arith.constant 0 : i32
    %c0_i32_0 = arith.constant 0 : i32
    %c0_i32_1 = arith.constant 0 : i32
    return %c0_i32, %c0_i32_0 : i32, i32
  }
  func.func @transform_6(%arg0: i32) -> (i32, i32) {
    %c0_i32 = arith.constant 0 : i32
    %c0_i32_0 = arith.constant 0 : i32
    %c0_i32_1 = arith.constant 0 : i32
    return %c0_i32, %c0_i32_0 : i32, i32
  }
  func.func @transform_7(%arg0: i32) -> (i32, i32) {
    %c0_i32 = arith.constant 0 : i32
    %c0_i32_0 = arith.constant 0 : i32
    return %arg0, %c0_i32 : i32, i32
  }
}

</mosaic_0001>

<llo_original>
// kernel: tpu_custom_call.1
$region0: #{tpu_custom_call.1}
  #allocation0 [shape = 'u32[]', space=smem, size = 0x4, offset = 0x4, fixed_abs, tag = 'smem constant byte address 0x4 - core index']
  #allocation1 [shape = 'u32[144,128]{1,0:T(1,128)}', space=vmem, size = 0x12000, scoped, tag = 'internal scratch']
  %s0 = inlined_call_operand.vmem [shape: f32[8,41], index: 0, kind: input, shape index: {}]
  %s1 = inlined_call_operand.vmem [shape: f32[41,20], index: 1, kind: input, shape index: {}]
  %s2 = inlined_call_operand.vmem [shape: f32[1,20], index: 2, kind: input, shape index: {}]
  %s3 = inlined_call_operand.vmem [shape: f32[20,10], index: 3, kind: input, shape index: {}]
  %s4 = inlined_call_operand.vmem [shape: f32[1,10], index: 4, kind: input, shape index: {}]
  %s5 = inlined_call_operand.vmem [shape: f32[10,4], index: 5, kind: input, shape index: {}]
  %s6 = inlined_call_operand.vmem [shape: f32[1,4], index: 6, kind: input, shape index: {}]
  %s7 = inlined_call_operand.vmem [shape: f32[8,4], index: 7, kind: output, shape index: {}]
  %s8 = sld [smem:[#allocation0]]
  $region38: #{tpu_custom_call.1} parent=0
    _
  %s10 = ssub.s32 1, %s8
  %s11 = scalar_select 0, %s10, %s8
  // Predicated region
  $region2: #{tpu_custom_call.1} parent=0 // pred_check
    _
  $region3: #{tpu_custom_call.1} parent=0 // pred_check_branch
    %13 = sbr.rel (0) target = $region5
  $region4: #{tpu_custom_call.1} parent=0 // pred_region
    _
  $region5: #{tpu_custom_call.1} parent=0 // pred_fallthru
    _
  // Predicated region
  $region6: #{tpu_custom_call.1} parent=0 // pred_check
    _
  $region7: #{tpu_custom_call.1} parent=0 // pred_check_branch
    %15 = sbr.rel (0) target = $region9
  $region8: #{tpu_custom_call.1} parent=0 // pred_region
    _
  $region9: #{tpu_custom_call.1} parent=0 // pred_fallthru
    _
  // Predicated region
  $region10: #{tpu_custom_call.1} parent=0 // pred_check
    _
  $region11: #{tpu_custom_call.1} parent=0 // pred_check_branch
    %17 = sbr.rel (0) target = $region13
  $region12: #{tpu_custom_call.1} parent=0 // pred_region
    _
  $region13: #{tpu_custom_call.1} parent=0 // pred_fallthru
    _
  // Predicated region
  $region14: #{tpu_custom_call.1} parent=0 // pred_check
    _
  $region15: #{tpu_custom_call.1} parent=0 // pred_check_branch
    %19 = sbr.rel (0) target = $region17
  $region16: #{tpu_custom_call.1} parent=0 // pred_region
    _
  $region17: #{tpu_custom_call.1} parent=0 // pred_fallthru
    _
  // Predicated region
  $region18: #{tpu_custom_call.1} parent=0 // pred_check
    _
  $region19: #{tpu_custom_call.1} parent=0 // pred_check_branch
    %21 = sbr.rel (0) target = $region21
  $region20: #{tpu_custom_call.1} parent=0 // pred_region
    _
  $region21: #{tpu_custom_call.1} parent=0 // pred_fallthru
    _
  // Predicated region
  $region22: #{tpu_custom_call.1} parent=0 // pred_check
    _
  $region23: #{tpu_custom_call.1} parent=0 // pred_check_branch
    %23 = sbr.rel (0) target = $region25
  $region24: #{tpu_custom_call.1} parent=0 // pred_region
    _
  $region25: #{tpu_custom_call.1} parent=0 // pred_fallthru
    _
  // Predicated region
  $region26: #{tpu_custom_call.1} parent=0 // pred_check
    _
  $region27: #{tpu_custom_call.1} parent=0 // pred_check_branch
    %25 = sbr.rel (0) target = $region29
  $region28: #{tpu_custom_call.1} parent=0 // pred_region
    _
  $region29: #{tpu_custom_call.1} parent=0 // pred_fallthru
    _
  %v26 = vld [vmem:[%s0] sm:$0xff]
  %v27 = vld [vmem:[%s1] sm:$0xff]
  %v28 = vld [vmem:[%s1 + $0x8] sm:$0xff]
  %v29 = vld [vmem:[%s1 + $0x10] sm:$0xff]
  %v30 = vld [vmem:[%s1 + $0x18] sm:$0xff]
  %v31 = vld [vmem:[%s1 + $0x20] sm:$0xff]
  %v32 = vld [vmem:[%s1 + $0x28] sm:$0x1]
  %v33 = vld [vmem:[%s2] sm:$0x1]
  %v35 = vlaneseq
  %v36 = vshrl.u32 %v35, 7
  %v37 = vsub.s32 0, %v36
  %v38 = vrot.slane %v33, %v37
  %vm40 = vcmask 334848
  %v42 = vsel %vm40, %v26, 0
  %vm44 = vcmask 1040384
  %v46 = vsel %vm44, %v32, 0
  %48 = vmatprep.subr.mxu0 0.0
  %49 = vmatpush1.msra.mxu0 0.0
  %50 = vmatprep.subr.mxu0 0.0
  %51 = vmatpush1.msra.mxu0 0.0
  %52 = vmatprep.subr.mxu0 0.0
  %53 = vmatpush1.msra.mxu0 0.0
  %54 = vmatprep.subr.mxu0 0.0
  %55 = vmatpush1.msra.mxu0 0.0
  %56 = vmatprep.subr.mxu0 0.0
  %57 = vmatpush1.msra.mxu0 0.0
  %58 = vmatprep.subr.mxu0 0.0
  %59 = vmatpush1.msra.mxu0 0.0
  %60 = vmatprep.subr.mxu0 0.0
  %61 = vmatpush1.msra.mxu0 0.0
  %62 = vmatprep.subr.mxu0 0.0
  %63 = vmatpush1.msra.mxu0 0.0
  %64 = vmatprep.subr.mxu0 0.0
  %65 = vmatpush1.msra.mxu0 0.0
  %66 = vmatprep.subr.mxu0 0.0
  %67 = vmatpush1.msra.mxu0 0.0
  %68 = vmatprep.subr.mxu0 0.0
  %69 = vmatpush1.msra.mxu0 %v46
  %70 = vmatprep.subr.mxu0 0.0
  %71 = vmatpush1.msra.mxu0 %v31
  %72 = vmatprep.subr.mxu0 0.0
  %73 = vmatpush1.msra.mxu0 %v30
  %74 = vmatprep.subr.mxu0 0.0
  %75 = vmatpush1.msra.mxu0 %v29
  %76 = vmatprep.subr.mxu0 0.0
  %77 = vmatpush1.msra.mxu0 %v28
  %78 = vmatprep.subr.mxu0 0.0
  %79 = vmatpush1.msra.mxu0 %v27
  %80 = vmatprep.subr.mxu0 0.0
  %81 = vmatpush2.msra.mxu0 0.0
  %82 = vmatprep.subr.mxu0 0.0
  %83 = vmatpush2.msra.mxu0 0.0
  %84 = vmatprep.subr.mxu0 0.0
  %85 = vmatpush2.msra.mxu0 0.0
  %86 = vmatprep.subr.mxu0 0.0
  %87 = vmatpush2.msra.mxu0 0.0
  %88 = vmatprep.subr.mxu0 0.0
  %89 = vmatpush2.msra.mxu0 0.0
  %90 = vmatprep.subr.mxu0 0.0
  %91 = vmatpush2.msra.mxu0 0.0
  %92 = vmatprep.subr.mxu0 0.0
  %93 = vmatpush2.msra.mxu0 0.0
  %94 = vmatprep.subr.mxu0 0.0
  %95 = vmatpush2.msra.mxu0 0.0
  %96 = vmatprep.subr.mxu0 0.0
  %97 = vmatpush2.msra.mxu0 0.0
  %98 = vmatprep.subr.mxu0 0.0
  %99 = vmatpush2.msra.mxu0 0.0
  %100 = vmatprep.subr.mxu0 0.0
  %101 = vmatpush2.msra.mxu0 0.0
  %102 = vmatprep.subr.mxu0 0.0
  %103 = vmatpush2.msra.mxu0 0.0
  %104 = vmatprep.subr.mxu0 0.0
  %105 = vmatpush2.msra.mxu0 0.0
  %106 = vmatprep.subr.mxu0 0.0
  %107 = vmatpush2.msra.mxu0 0.0
  %108 = vmatprep.subr.mxu0 0.0
  %109 = vmatpush2.msra.mxu0 0.0
  %110 = vmatprep.subr.mxu0 0.0
  %111 = vmatpush2.msra.mxu0 0.0
  %112 = vmatprep.mubr.f32.mxu0 0.0
  %113 = vmatmul.mubr.f32.gmra.mxu0 %v42
  %v114 = vpop.f32.mrf.mxu0
  %v115 = vadd.f32 %v38, %v114
  %v116 = vpop.f32.mrf.mxu0
  %117 = vdwg.mxu0
  %v118 = vmax.f32 %v115, 0.0
  %v119 = vld [vmem:[%s3] sm:$0xff]
  %v120 = vld [vmem:[%s3 + $0x8] sm:$0xff]
  %v121 = vld [vmem:[%s3 + $0x10] sm:$0xf]
  %v122 = vld [vmem:[%s4] sm:$0x1]
  %v124 = vlaneseq
  %v125 = vshrl.u32 %v124, 7
  %v126 = vsub.s32 0, %v125
  %v127 = vrot.slane %v122, %v126
  %vm129 = vcmask 162816
  %v131 = vsel %vm129, %v118, 0
  %vm133 = vcmask 1043456
  %v135 = vsel %vm133, %v121, 0
  %137 = vmatprep.subr.mxu0 0.0
  %138 = vmatpush1.msra.mxu0 0.0
  %139 = vmatprep.subr.mxu0 0.0
  %140 = vmatpush1.msra.mxu0 0.0
  %141 = vmatprep.subr.mxu0 0.0
  %142 = vmatpush1.msra.mxu0 0.0
  %143 = vmatprep.subr.mxu0 0.0
  %144 = vmatpush1.msra.mxu0 0.0
  %145 = vmatprep.subr.mxu0 0.0
  %146 = vmatpush1.msra.mxu0 0.0
  %147 = vmatprep.subr.mxu0 0.0
  %148 = vmatpush1.msra.mxu0 0.0
  %149 = vmatprep.subr.mxu0 0.0
  %150 = vmatpush1.msra.mxu0 0.0
  %151 = vmatprep.subr.mxu0 0.0
  %152 = vmatpush1.msra.mxu0 0.0
  %153 = vmatprep.subr.mxu0 0.0
  %154 = vmatpush1.msra.mxu0 0.0
  %155 = vmatprep.subr.mxu0 0.0
  %156 = vmatpush1.msra.mxu0 0.0
  %157 = vmatprep.subr.mxu0 0.0
  %158 = vmatpush1.msra.mxu0 0.0
  %159 = vmatprep.subr.mxu0 0.0
  %160 = vmatpush1.msra.mxu0 0.0
  %161 = vmatprep.subr.mxu0 0.0
  %162 = vmatpush1.msra.mxu0 0.0
  %163 = vmatprep.subr.mxu0 0.0
  %164 = vmatpush1.msra.mxu0 %v135
  %165 = vmatprep.subr.mxu0 0.0
  %166 = vmatpush1.msra.mxu0 %v120
  %167 = vmatprep.subr.mxu0 0.0
  %168 = vmatpush1.msra.mxu0 %v119
  %169 = vmatprep.subr.mxu0 0.0
  %170 = vmatpush2.msra.mxu0 0.0
  %171 = vmatprep.subr.mxu0 0.0
  %172 = vmatpush2.msra.mxu0 0.0
  %173 = vmatprep.subr.mxu0 0.0
  %174 = vmatpush2.msra.mxu0 0.0
  %175 = vmatprep.subr.mxu0 0.0
  %176 = vmatpush2.msra.mxu0 0.0
  %177 = vmatprep.subr.mxu0 0.0
  %178 = vmatpush2.msra.mxu0 0.0
  %179 = vmatprep.subr.mxu0 0.0
  %180 = vmatpush2.msra.mxu0 0.0
  %181 = vmatprep.subr.mxu0 0.0
  %182 = vmatpush2.msra.mxu0 0.0
  %183 = vmatprep.subr.mxu0 0.0
  %184 = vmatpush2.msra.mxu0 0.0
  %185 = vmatprep.subr.mxu0 0.0
  %186 = vmatpush2.msra.mxu0 0.0
  %187 = vmatprep.subr.mxu0 0.0
  %188 = vmatpush2.msra.mxu0 0.0
  %189 = vmatprep.subr.mxu0 0.0
  %190 = vmatpush2.msra.mxu0 0.0
  %191 = vmatprep.subr.mxu0 0.0
  %192 = vmatpush2.msra.mxu0 0.0
  %193 = vmatprep.subr.mxu0 0.0
  %194 = vmatpush2.msra.mxu0 0.0
  %195 = vmatprep.subr.mxu0 0.0
  %196 = vmatpush2.msra.mxu0 0.0
  %197 = vmatprep.subr.mxu0 0.0
  %198 = vmatpush2.msra.mxu0 0.0
  %199 = vmatprep.subr.mxu0 0.0
  %200 = vmatpush2.msra.mxu0 0.0
  %201 = vmatprep.mubr.f32.mxu0 0.0
  %202 = vmatmul.mubr.f32.gmra.mxu0 %v131
  %v203 = vpop.f32.mrf.mxu0
  %v204 = vadd.f32 %v127, %v203
  %v205 = vpop.f32.mrf.mxu0
  %206 = vdwg.mxu0
  %v207 = vmax.f32 %v204, 0.0
  %v208 = vld [vmem:[%s5] sm:$0xff]
  %v209 = vld [vmem:[%s5 + $0x8] sm:$0x3]
  %v210 = vld [vmem:[%s6] sm:$0x1]
  %v212 = vlaneseq
  %v213 = vshrl.u32 %v212, 7
  %v214 = vsub.s32 0, %v213
  %v215 = vrot.slane %v210, %v214
  %vm217 = vcmask 80896
  %v219 = vsel %vm217, %v207, 0
  %vm221 = vcmask 1041408
  %v223 = vsel %vm221, %v209, 0
  %225 = vmatprep.subr.mxu0 0.0
  %226 = vmatpush1.msra.mxu0 0.0
  %227 = vmatprep.subr.mxu0 0.0
  %228 = vmatpush1.msra.mxu0 0.0
  %229 = vmatprep.subr.mxu0 0.0
  %230 = vmatpush1.msra.mxu0 0.0
  %231 = vmatprep.subr.mxu0 0.0
  %232 = vmatpush1.msra.mxu0 0.0
  %233 = vmatprep.subr.mxu0 0.0
  %234 = vmatpush1.msra.mxu0 0.0
  %235 = vmatprep.subr.mxu0 0.0
  %236 = vmatpush1.msra.mxu0 0.0
  %237 = vmatprep.subr.mxu0 0.0
  %238 = vmatpush1.msra.mxu0 0.0
  %239 = vmatprep.subr.mxu0 0.0
  %240 = vmatpush1.msra.mxu0 0.0
  %241 = vmatprep.subr.mxu0 0.0
  %242 = vmatpush1.msra.mxu0 0.0
  %243 = vmatprep.subr.mxu0 0.0
  %244 = vmatpush1.msra.mxu0 0.0
  %245 = vmatprep.subr.mxu0 0.0
  %246 = vmatpush1.msra.mxu0 0.0
  %247 = vmatprep.subr.mxu0 0.0
  %248 = vmatpush1.msra.mxu0 0.0
  %249 = vmatprep.subr.mxu0 0.0
  %250 = vmatpush1.msra.mxu0 0.0
  %251 = vmatprep.subr.mxu0 0.0
  %252 = vmatpush1.msra.mxu0 0.0
  %253 = vmatprep.subr.mxu0 0.0
  %254 = vmatpush1.msra.mxu0 %v223
  %255 = vmatprep.subr.mxu0 0.0
  %256 = vmatpush1.msra.mxu0 %v208
  %257 = vmatprep.subr.mxu0 0.0
  %258 = vmatpush2.msra.mxu0 0.0
  %259 = vmatprep.subr.mxu0 0.0
  %260 = vmatpush2.msra.mxu0 0.0
  %261 = vmatprep.subr.mxu0 0.0
  %262 = vmatpush2.msra.mxu0 0.0
  %263 = vmatprep.subr.mxu0 0.0
  %264 = vmatpush2.msra.mxu0 0.0
  %265 = vmatprep.subr.mxu0 0.0
  %266 = vmatpush2.msra.mxu0 0.0
  %267 = vmatprep.subr.mxu0 0.0
  %268 = vmatpush2.msra.mxu0 0.0
  %269 = vmatprep.subr.mxu0 0.0
  %270 = vmatpush2.msra.mxu0 0.0
  %271 = vmatprep.subr.mxu0 0.0
  %272 = vmatpush2.msra.mxu0 0.0
  %273 = vmatprep.subr.mxu0 0.0
  %274 = vmatpush2.msra.mxu0 0.0
  %275 = vmatprep.subr.mxu0 0.0
  %276 = vmatpush2.msra.mxu0 0.0
  %277 = vmatprep.subr.mxu0 0.0
  %278 = vmatpush2.msra.mxu0 0.0
  %279 = vmatprep.subr.mxu0 0.0
  %280 = vmatpush2.msra.mxu0 0.0
  %281 = vmatprep.subr.mxu0 0.0
  %282 = vmatpush2.msra.mxu0 0.0
  %283 = vmatprep.subr.mxu0 0.0
  %284 = vmatpush2.msra.mxu0 0.0
  %285 = vmatprep.subr.mxu0 0.0
  %286 = vmatpush2.msra.mxu0 0.0
  %287 = vmatprep.subr.mxu0 0.0
  %288 = vmatpush2.msra.mxu0 0.0
  %289 = vmatprep.mubr.f32.mxu0 0.0
  %290 = vmatmul.mubr.f32.gmra.mxu0 %v219
  %v291 = vpop.f32.mrf.mxu0
  %v292 = vadd.f32 %v215, %v291
  %v293 = vpop.f32.mrf.mxu0
  %294 = vdwg.mxu0
  %vm295 = vcmask 31744
  %296 = vst.msk [vmem:[%s7] sm:$0xff] %vm295, %v292
  // Predicated region
  $region30: #{tpu_custom_call.1} parent=0 // pred_check
    _
  $region31: #{tpu_custom_call.1} parent=0 // pred_check_branch
    %298 = sbr.rel (0) target = $region33
  $region32: #{tpu_custom_call.1} parent=0 // pred_region
    _
  $region33: #{tpu_custom_call.1} parent=0 // pred_fallthru
    _
  // Predicated region
  $region34: #{tpu_custom_call.1} parent=0 // pred_check
    _
  $region35: #{tpu_custom_call.1} parent=0 // pred_check_branch
    %300 = sbr.rel (0) target = $region37
  $region36: #{tpu_custom_call.1} parent=0 // pred_region
    _
  $region37: #{tpu_custom_call.1} parent=0 // pred_fallthru
    _

</llo_original>
